<compile_context>
chip_gen: v5e
topology: v5e:2x2
jax: 0.10.0
libtpu: 0.0.40
codegen_flags: <defaults>
</compile_context>

<pallas_src>
import functools

import jax
import jax.numpy as jnp
import numpy as np
from jax.experimental import pallas as pl
from jax.experimental.pallas import tpu as pltpu


# ----------------------------------------------------------------------------
# Pallas kernel: one MXU matmul + fused bias, lane-dense output
# ----------------------------------------------------------------------------
def _embedding_kernel(x_ref, w_ref, b_ref, o_ref):
    """Fused Embedding forward on one row tile.

    x: (TR, L)     f32   rows = (b, m), columns = time steps
    w: (L, N*D)    bf16  im2col + replicate-pad folded conv weight
    b: (1, N*D)    f32   per-(n, d) bias (bias tiled over patches)
    o: (TR, N*D)   f32   lane-dense: column block n holds patch n's embedding
    """
    acc = jnp.dot(x_ref[...].astype(w_ref.dtype), w_ref[...],
                  preferred_element_type=jnp.float32)
    o_ref[...] = acc + b_ref[...]


# ----------------------------------------------------------------------------
# Parameter prep (done once): fold im2col + replicate pad into the conv weight
# ----------------------------------------------------------------------------
def prepare_embedding_params(w, b, *, L, P, S, mxu_dtype=jnp.bfloat16):
    """Build the (L, N*D) folded weight and (1, N*D) bias.

      out[r, n*D + d] = sum_c x[r, c] * W_fold[c, n*D + d] + b[d]

    is mathematically identical to
      Conv1d(1, D, kernel_size=P, stride=S)(replicate_pad(x[r], P - S)).

    The replicate pad is folded by adding the taps that would read the padded
    columns (all equal to x[:, L-1]) into row L-1 of the weight.
    """
    P_, D = w.shape
    assert P_ == P
    Lp = L + (P - S)                      # padded length
    N = (Lp - P) // S + 1                 # number of patches

    w_np = np.asarray(w, dtype=np.float32)          # (P, D)
    band = np.zeros((Lp, N, D), np.float32)
    for n in range(N):                              # place taps for patch n
        band[n * S:n * S + P, n, :] = w_np
    w_fold = band[:L].copy()
    w_fold[L - 1] += band[L:].sum(axis=0)           # fold replicate right-pad
    w_fold = w_fold.reshape(L, N * D)

    b_fold = np.tile(np.asarray(b, np.float32).reshape(1, D), (1, N))  # (1, N*D)
    return (jnp.asarray(w_fold, dtype=mxu_dtype),
            jnp.asarray(b_fold, dtype=jnp.float32))


# ----------------------------------------------------------------------------
# Forward wrapper (only layout plumbing outside the kernel)
# ----------------------------------------------------------------------------
def embedding_forward(x, w_fold, b_fold, *, D):
    """x: (B, M, L) f32  ->  (B, M, D, N) f32 (PyTorch Embedding layout)."""
    B, M, L = x.shape
    BM = B * M
    ND = w_fold.shape[1]
    N = ND // D

    x_rows = x.reshape(BM, L)                        # '(b m) l' — leading-dim merge

    # Rows are fully independent -> row-tiled "parallel" grid (shards across
    # TensorCores once BM grows; a single grid step at the toy shape).
    TR = 8 if BM % 8 == 0 else BM
    grid = (BM // TR,)

    out_flat = pl.pallas_call(
        _embedding_kernel,
        out_shape=jax.ShapeDtypeStruct((BM, ND), jnp.float32),
        grid=grid,
        in_specs=[
            pl.BlockSpec((TR, L), lambda i: (i, 0)),
            pl.BlockSpec((L, ND), lambda i: (0, 0)),
            pl.BlockSpec((1, ND), lambda i: (0, 0)),
        ],
        out_specs=pl.BlockSpec((TR, ND), lambda i: (i, 0)),
        compiler_params=pltpu.CompilerParams(dimension_semantics=("parallel",)),
    )(x_rows, w_fold, b_fold)

    # (BM, (n, d)) -> (B, M, D, N): 64*K-element permute is XLA layout plumbing;
    # fusing it in-kernel would make the store lane-sparse (N = 4 lanes).
    return out_flat.reshape(B, M, N, D).transpose(0, 1, 3, 2)


if __name__ == "__main__":
    # Embedding(P=8, S=4, D=2048) applied to x: (B=2, M=4, L=16) -> (B, M, D, N=4)
    B, M, L = 2, 4, 16
    P, S, D = 8, 4, 2048

    key = jax.random.PRNGKey(0)
    kx, kw, kb = jax.random.split(key, 3)
    x = jax.random.normal(kx, (B, M, L), dtype=jnp.float32)
    # Conv1d(1, D, kernel_size=P) weight is (D, 1, P) in PyTorch; stored here
    # pre-transposed as (P, D) taps-by-embed.
    w = (0.05 * jax.random.normal(kw, (P, D))).astype(jnp.float32)
    b = (0.05 * jax.random.normal(kb, (D,))).astype(jnp.float32)

    w_fold, b_fold = prepare_embedding_params(w, b, L=L, P=P, S=S)

    fwd = jax.jit(functools.partial(embedding_forward, D=D))
    out = jax.block_until_ready(fwd(x, w_fold, b_fold))

    N = (L + (P - S) - P) // S + 1
    assert out.shape == (B, M, D, N), out.shape

    # Pure-JAX f32 reference mirroring the PyTorch forward (replicate pad +
    # strided patch conv + bias).  Kernel uses bf16 MXU operands with f32
    # accumulation -> generous tolerance.
    x_bm = x.reshape(B * M, L)
    x_pad = jnp.concatenate(
        [x_bm, jnp.broadcast_to(x_bm[:, -1:], (B * M, P - S))], axis=1)
    patches = jnp.stack([x_pad[:, n * S:n * S + P] for n in range(N)], axis=1)
    ref = jnp.einsum('rnp,pd->rnd', patches, w) + b[None, None, :]
    ref = ref.reshape(B, M, N, D).transpose(0, 1, 3, 2)
    np.testing.assert_allclose(np.asarray(out), np.asarray(ref),
                               rtol=5e-2, atol=5e-2)

    print("KERNEL_OK")
</pallas_src>

<mosaic_0001>
module attributes {stable_mosaic.version = 11 : i64} {
  func.func @_embedding_kernel(%arg0: i32, %arg1: memref<8x16xf32, #tpu.memory_space<vmem>>, %arg2: memref<16x8192xbf16, #tpu.memory_space<vmem>>, %arg3: memref<1x8192xf32, #tpu.memory_space<vmem>>, %arg4: memref<8x8192xf32, #tpu.memory_space<vmem>>) attributes {dimension_semantics = [#tpu.dimension_semantics<parallel>], iteration_bounds = array<i64: 1>, scalar_prefetch = 0 : i64, scratch_operands = 0 : i64, tpu.core_type = #tpu.core_type<tc>, window_params = [{transform_indices = @transform_0, window_bounds = array<i64: 8, 16>}, {pipeline_mode = #tpu.pipeline_mode<synchronous>, transform_indices = @transform_1, window_bounds = array<i64: 16, 8192>}, {pipeline_mode = #tpu.pipeline_mode<synchronous>, transform_indices = @transform_2, window_bounds = array<i64: 1, 8192>}, {transform_indices = @transform_3, window_bounds = array<i64: 8, 8192>}]} {
    %c0 = arith.constant 0 : index
    %c0_0 = arith.constant 0 : index
    %0 = vector.load %arg1[%c0, %c0_0] : memref<8x16xf32, #tpu.memory_space<vmem>>, vector<8x16xf32>
    %1 = arith.truncf %0 : vector<8x16xf32> to vector<8x16xbf16>
    %c0_1 = arith.constant 0 : index
    %c0_2 = arith.constant 0 : index
    %2 = vector.load %arg2[%c0_1, %c0_2] : memref<16x8192xbf16, #tpu.memory_space<vmem>>, vector<16x8192xbf16>
    %cst = arith.constant dense<0.000000e+00> : vector<8x8192xf32>
    %3 = tpu.matmul %1, %2, %cst {dimension_numbers = #tpu.dot_dimension_numbers<[1], [0], [0], [1], [0, 0, 1, 1], [], []>} : vector<8x16xbf16>, vector<16x8192xbf16>, vector<8x8192xf32> -> vector<8x8192xf32>
    %c0_3 = arith.constant 0 : index
    %c0_4 = arith.constant 0 : index
    %4 = vector.load %arg3[%c0_3, %c0_4] : memref<1x8192xf32, #tpu.memory_space<vmem>>, vector<1x8192xf32>
    %5 = vector.broadcast %4 : vector<1x8192xf32> to vector<8x8192xf32>
    %6 = arith.addf %3, %5 : vector<8x8192xf32>
    %c0_5 = arith.constant 0 : index
    %c0_6 = arith.constant 0 : index
    %7 = vector.load %arg4[%c0_5, %c0_6] : memref<8x8192xf32, #tpu.memory_space<vmem>>, vector<8x8192xf32>
    tpu.vector_store %arg4[%c0_5, %c0_6], %6 {strides = array<i32>} : memref<8x8192xf32, #tpu.memory_space<vmem>>, vector<8x8192xf32>,
    return
  }
  func.func @transform_0(%arg0: i32) -> (i32, i32) {
    %c0_i32 = arith.constant 0 : i32
    %c0_i32_0 = arith.constant 0 : i32
    return %arg0, %c0_i32 : i32, i32
  }
  func.func @transform_1(%arg0: i32) -> (i32, i32) {
    %c0_i32 = arith.constant 0 : i32
    %c0_i32_0 = arith.constant 0 : i32
    %c0_i32_1 = arith.constant 0 : i32
    return %c0_i32, %c0_i32_0 : i32, i32
  }
  func.func @transform_2(%arg0: i32) -> (i32, i32) {
    %c0_i32 = arith.constant 0 : i32
    %c0_i32_0 = arith.constant 0 : i32
    %c0_i32_1 = arith.constant 0 : i32
    return %c0_i32, %c0_i32_0 : i32, i32
  }
  func.func @transform_3(%arg0: i32) -> (i32, i32) {
    %c0_i32 = arith.constant 0 : i32
    %c0_i32_0 = arith.constant 0 : i32
    return %arg0, %c0_i32 : i32, i32
  }
}

</mosaic_0001>

<llo_original>
// kernel: embedding_forward.1
$region0: #{embedding_forward.1}
  #allocation0 [shape = 'u32[]', space=smem, size = 0x4, offset = 0x4, fixed_abs, tag = 'smem constant byte address 0x4 - core index']
  #allocation1 [shape = 'u32[72,128]{1,0:T(1,128)}', space=vmem, size = 0x9000, scoped, tag = 'internal scratch']
  %s0 = inlined_call_operand.hbm [shape: f32[8,16], index: 0, kind: input, shape index: {}]
  %s1 = inlined_call_operand.hbm [shape: bf16[16,8192], index: 1, kind: input, shape index: {}]
  %s2 = inlined_call_operand.hbm [shape: f32[1,8192], index: 2, kind: input, shape index: {}]
  %s3 = inlined_call_operand.vmem [shape: f32[8,8192], index: 3, kind: output, shape index: {}]
  %s4 = sld [smem:[#allocation0]]
  $region34: #{embedding_forward.1} parent=0
    _
  %s6 = ssub.s32 1, %s4
  %s7 = scalar_select 0, %s6, %s4
  $region1: #{embedding_forward.1} parent=0
    #allocation2 [shape = 'u8[4096]{0}', space=vmem, size = 0x1000, scoped, tag = 'input window, operand 0, single buffered']
    #allocation3 [shape = 's32[1]{0}', space=sflag, size = 0x4, scoped, tag = 'scoped memory for embedding_forward.1']
    #allocation4 [shape = 'u8[262144]{0}', space=vmem, size = 0x40000, scoped, tag = 'input window, operand 1, single buffered']
    #allocation5 [shape = 's32[1]{0}', space=sflag, size = 0x4, scoped, tag = 'scoped memory for embedding_forward.1']
    #allocation6 [shape = 'u8[32768]{0}', space=vmem, size = 0x8000, scoped, tag = 'input window, operand 2, single buffered']
    %8 = vsyncpa [#allocation3], 0
    %9 = vsyncpa [#allocation5], 0
    // Predicated region
    $region2: #{embedding_forward.1} parent=1 // pred_check
      _
    $region3: #{embedding_forward.1} parent=1 // pred_check_branch
      %11 = sbr.rel (0) target = $region5
    $region4: #{embedding_forward.1} parent=1 // pred_region
      %13 = vsyncadd [#allocation3], 0
      %s15 = sshll.u32 %s0, 4
      %s16 = int_to_ptr.hbm [resolvable:$true] %s15
      %s17 = sshll.u32 [#allocation2], 4
      %s18 = int_to_ptr.vmem [resolvable:$true] %s17
      %20 = dma.hbm_to_vmem [thread:$0]  %s16, 128, %s18, [#allocation3]
    $region5: #{embedding_forward.1} parent=1 // pred_fallthru
      _
    // Predicated region
    $region6: #{embedding_forward.1} parent=1 // pred_check
      _
    $region7: #{embedding_forward.1} parent=1 // pred_check_branch
      %22 = sbr.rel (0) target = $region9
    $region8: #{embedding_forward.1} parent=1 // pred_region
      %24 = vsyncadd [#allocation5], 0
      %s25 = sshll.u32 %s1, 4
      %s26 = int_to_ptr.hbm [resolvable:$true] %s25
      %s27 = sshll.u32 [#allocation4], 4
      %s28 = int_to_ptr.vmem [resolvable:$true] %s27
      %33 = dma.hbm_to_vmem [thread:$0]  %s26, 8192, %s28, [#allocation5], 4096, 4096, 256
    $region9: #{embedding_forward.1} parent=1 // pred_fallthru
      _
    // Predicated region
    $region10: #{embedding_forward.1} parent=1 // pred_check
      _
    $region11: #{embedding_forward.1} parent=1 // pred_check_branch
      %35 = sbr.rel (0) target = $region13
    $region12: #{embedding_forward.1} parent=1 // pred_region
      %37 = vsyncadd [#allocation5], 0
      %s39 = sshll.u32 %s2, 4
      %s40 = int_to_ptr.hbm [resolvable:$true] %s39
      %s41 = sshll.u32 [#allocation6], 4
      %s42 = int_to_ptr.vmem [resolvable:$true] %s41
      %44 = dma.hbm_to_vmem [thread:$0]  %s40, 1024, %s42, [#allocation5]
    $region13: #{embedding_forward.1} parent=1 // pred_fallthru
      _
    // Predicated region
    $region14: #{embedding_forward.1} parent=1 // pred_check
      _
    $region15: #{embedding_forward.1} parent=1 // pred_check_branch
      %46 = sbr.rel (0) target = $region17
    $region16: #{embedding_forward.1} parent=1 // pred_region
      %48 = dma.done [#allocation3], 128
    $region17: #{embedding_forward.1} parent=1 // pred_fallthru
      _
    // Predicated region
    $region18: #{embedding_forward.1} parent=1 // pred_check
      _
    $region19: #{embedding_forward.1} parent=1 // pred_check_branch
      %50 = sbr.rel (0) target = $region21
    $region20: #{embedding_forward.1} parent=1 // pred_region
      %52 = dma.done [#allocation5], 8192
    $region21: #{embedding_forward.1} parent=1 // pred_fallthru
      _
    // Predicated region
    $region22: #{embedding_forward.1} parent=1 // pred_check
      _
    $region23: #{embedding_forward.1} parent=1 // pred_check_branch
      %54 = sbr.rel (0) target = $region25
    $region24: #{embedding_forward.1} parent=1 // pred_region
      %56 = dma.done [#allocation5], 1024
    $region25: #{embedding_forward.1} parent=1 // pred_fallthru
      _
    %v58 = vld [vmem:[#allocation2] sm:$0xff]
    %v59 = vpack.c.bf16 %v58, %v58
    %v60 = vld [vmem:[#allocation4] sm:$0xff]
    %v61 = vld [vmem:[#allocation4 + $0x8] sm:$0xff]
    %v62 = vld [vmem:[#allocation4 + $0x10] sm:$0xff]
    %v63 = vld [vmem:[#allocation4 + $0x18] sm:$0xff]
    %v64 = vld [vmem:[#allocation4 + $0x20] sm:$0xff]
    %v65 = vld [vmem:[#allocation4 + $0x28] sm:$0xff]
    %v66 = vld [vmem:[#allocation4 + $0x30] sm:$0xff]
    %v67 = vld [vmem:[#allocation4 + $0x38] sm:$0xff]
    %v68 = vld [vmem:[#allocation4 + $0x40] sm:$0xff]
    %v69 = vld [vmem:[#allocation4 + $0x48] sm:$0xff]
    %v70 = vld [vmem:[#allocation4 + $0x50] sm:$0xff]
    %v71 = vld [vmem:[#allocation4 + $0x58] sm:$0xff]
    %v72 = vld [vmem:[#allocation4 + $0x60] sm:$0xff]
    %v73 = vld [vmem:[#allocation4 + $0x68] sm:$0xff]
    %v74 = vld [vmem:[#allocation4 + $0x70] sm:$0xff]
    %v75 = vld [vmem:[#allocation4 + $0x78] sm:$0xff]
    %v76 = vld [vmem:[#allocation4 + $0x80] sm:$0xff]
    %v77 = vld [vmem:[#allocation4 + $0x88] sm:$0xff]
    %v78 = vld [vmem:[#allocation4 + $0x90] sm:$0xff]
    %v79 = vld [vmem:[#allocation4 + $0x98] sm:$0xff]
    %v80 = vld [vmem:[#allocation4 + $0xa0] sm:$0xff]
    %v81 = vld [vmem:[#allocation4 + $0xa8] sm:$0xff]
    %v82 = vld [vmem:[#allocation4 + $0xb0] sm:$0xff]
    %v83 = vld [vmem:[#allocation4 + $0xb8] sm:$0xff]
    %v84 = vld [vmem:[#allocation4 + $0xc0] sm:$0xff]
    %v85 = vld [vmem:[#allocation4 + $0xc8] sm:$0xff]
    %v86 = vld [vmem:[#allocation4 + $0xd0] sm:$0xff]
    %v87 = vld [vmem:[#allocation4 + $0xd8] sm:$0xff]
    %v88 = vld [vmem:[#allocation4 + $0xe0] sm:$0xff]
    %v89 = vld [vmem:[#allocation4 + $0xe8] sm:$0xff]
    %v90 = vld [vmem:[#allocation4 + $0xf0] sm:$0xff]
    %v91 = vld [vmem:[#allocation4 + $0xf8] sm:$0xff]
    %v92 = vld [vmem:[#allocation4 + $0x100] sm:$0xff]
    %v93 = vld [vmem:[#allocation4 + $0x108] sm:$0xff]
    %v94 = vld [vmem:[#allocation4 + $0x110] sm:$0xff]
    %v95 = vld [vmem:[#allocation4 + $0x118] sm:$0xff]
    %v96 = vld [vmem:[#allocation4 + $0x120] sm:$0xff]
    %v97 = vld [vmem:[#allocation4 + $0x128] sm:$0xff]
    %v98 = vld [vmem:[#allocation4 + $0x130] sm:$0xff]
    %v99 = vld [vmem:[#allocation4 + $0x138] sm:$0xff]
    %v100 = vld [vmem:[#allocation4 + $0x140] sm:$0xff]
    %v101 = vld [vmem:[#allocation4 + $0x148] sm:$0xff]
    %v102 = vld [vmem:[#allocation4 + $0x150] sm:$0xff]
    %v103 = vld [vmem:[#allocation4 + $0x158] sm:$0xff]
    %v104 = vld [vmem:[#allocation4 + $0x160] sm:$0xff]
    %v105 = vld [vmem:[#allocation4 + $0x168] sm:$0xff]
    %v106 = vld [vmem:[#allocation4 + $0x170] sm:$0xff]
    %v107 = vld [vmem:[#allocation4 + $0x178] sm:$0xff]
    %v108 = vld [vmem:[#allocation4 + $0x180] sm:$0xff]
    %v109 = vld [vmem:[#allocation4 + $0x188] sm:$0xff]
    %v110 = vld [vmem:[#allocation4 + $0x190] sm:$0xff]
    %v111 = vld [vmem:[#allocation4 + $0x198] sm:$0xff]
    %v112 = vld [vmem:[#allocation4 + $0x1a0] sm:$0xff]
    %v113 = vld [vmem:[#allocation4 + $0x1a8] sm:$0xff]
    %v114 = vld [vmem:[#allocation4 + $0x1b0] sm:$0xff]
    %v115 = vld [vmem:[#allocation4 + $0x1b8] sm:$0xff]
    %v116 = vld [vmem:[#allocation4 + $0x1c0] sm:$0xff]
    %v117 = vld [vmem:[#allocation4 + $0x1c8] sm:$0xff]
    %v118 = vld [vmem:[#allocation4 + $0x1d0] sm:$0xff]
    %v119 = vld [vmem:[#allocation4 + $0x1d8] sm:$0xff]
    %v120 = vld [vmem:[#allocation4 + $0x1e0] sm:$0xff]
    %v121 = vld [vmem:[#allocation4 + $0x1e8] sm:$0xff]
    %v122 = vld [vmem:[#allocation4 + $0x1f0] sm:$0xff]
    %v123 = vld [vmem:[#allocation4 + $0x1f8] sm:$0xff]
    %v124 = vld [vmem:[#allocation6] sm:$0xff]
    %v125 = vld [vmem:[#allocation6 + $0x8] sm:$0xff]
    %v126 = vld [vmem:[#allocation6 + $0x10] sm:$0xff]
    %v127 = vld [vmem:[#allocation6 + $0x18] sm:$0xff]
    %v128 = vld [vmem:[#allocation6 + $0x20] sm:$0xff]
    %v129 = vld [vmem:[#allocation6 + $0x28] sm:$0xff]
    %v130 = vld [vmem:[#allocation6 + $0x30] sm:$0xff]
    %v131 = vld [vmem:[#allocation6 + $0x38] sm:$0xff]
    %v140 = vperm.slane %v124, 0
    %v141 = vperm.slane %v124, 1
    %v142 = vperm.slane %v124, 2
    %v143 = vperm.slane %v124, 3
    %v144 = vperm.slane %v124, 4
    %v145 = vperm.slane %v124, 5
    %v146 = vperm.slane %v124, 6
    %v147 = vperm.slane %v124, 7
    %v148 = vperm.slane %v125, 0
    %v149 = vperm.slane %v125, 1
    %v150 = vperm.slane %v125, 2
    %v151 = vperm.slane %v125, 3
    %v152 = vperm.slane %v125, 4
    %v153 = vperm.slane %v125, 5
    %v154 = vperm.slane %v125, 6
    %v155 = vperm.slane %v125, 7
    %v156 = vperm.slane %v126, 0
    %v157 = vperm.slane %v126, 1
    %v158 = vperm.slane %v126, 2
    %v159 = vperm.slane %v126, 3
    %v160 = vperm.slane %v126, 4
    %v161 = vperm.slane %v126, 5
    %v162 = vperm.slane %v126, 6
    %v163 = vperm.slane %v126, 7
    %v164 = vperm.slane %v127, 0
    %v165 = vperm.slane %v127, 1
    %v166 = vperm.slane %v127, 2
    %v167 = vperm.slane %v127, 3
    %v168 = vperm.slane %v127, 4
    %v169 = vperm.slane %v127, 5
    %v170 = vperm.slane %v127, 6
    %v171 = vperm.slane %v127, 7
    %v172 = vperm.slane %v128, 0
    %v173 = vperm.slane %v128, 1
    %v174 = vperm.slane %v128, 2
    %v175 = vperm.slane %v128, 3
    %v176 = vperm.slane %v128, 4
    %v177 = vperm.slane %v128, 5
    %v178 = vperm.slane %v128, 6
    %v179 = vperm.slane %v128, 7
    %v180 = vperm.slane %v129, 0
    %v181 = vperm.slane %v129, 1
    %v182 = vperm.slane %v129, 2
    %v183 = vperm.slane %v129, 3
    %v184 = vperm.slane %v129, 4
    %v185 = vperm.slane %v129, 5
    %v186 = vperm.slane %v129, 6
    %v187 = vperm.slane %v129, 7
    %v188 = vperm.slane %v130, 0
    %v189 = vperm.slane %v130, 1
    %v190 = vperm.slane %v130, 2
    %v191 = vperm.slane %v130, 3
    %v192 = vperm.slane %v130, 4
    %v193 = vperm.slane %v130, 5
    %v194 = vperm.slane %v130, 6
    %v195 = vperm.slane %v130, 7
    %v196 = vperm.slane %v131, 0
    %v197 = vperm.slane %v131, 1
    %v198 = vperm.slane %v131, 2
    %v199 = vperm.slane %v131, 3
    %v200 = vperm.slane %v131, 4
    %v201 = vperm.slane %v131, 5
    %v202 = vperm.slane %v131, 6
    %v203 = vperm.slane %v131, 7
    %v332 = vunpack.c.l.b16 %v60
    %v333 = vunpack.c.h.b16 %v60
    %v334 = vunpack.c.l.b16 %v61
    %v335 = vunpack.c.h.b16 %v61
    %v336 = vunpack.c.l.b16 %v62
    %v337 = vunpack.c.h.b16 %v62
    %v338 = vunpack.c.l.b16 %v63
    %v339 = vunpack.c.h.b16 %v63
    %v340 = vunpack.c.l.b16 %v64
    %v341 = vunpack.c.h.b16 %v64
    %v342 = vunpack.c.l.b16 %v65
    %v343 = vunpack.c.h.b16 %v65
    %v344 = vunpack.c.l.b16 %v66
    %v345 = vunpack.c.h.b16 %v66
    %v346 = vunpack.c.l.b16 %v67
    %v347 = vunpack.c.h.b16 %v67
    %v348 = vunpack.c.l.b16 %v68
    %v349 = vunpack.c.h.b16 %v68
    %v350 = vunpack.c.l.b16 %v69
    %v351 = vunpack.c.h.b16 %v69
    %v352 = vunpack.c.l.b16 %v70
    %v353 = vunpack.c.h.b16 %v70
    %v354 = vunpack.c.l.b16 %v71
    %v355 = vunpack.c.h.b16 %v71
    %v356 = vunpack.c.l.b16 %v72
    %v357 = vunpack.c.h.b16 %v72
    %v358 = vunpack.c.l.b16 %v73
    %v359 = vunpack.c.h.b16 %v73
    %v360 = vunpack.c.l.b16 %v74
    %v361 = vunpack.c.h.b16 %v74
    %v362 = vunpack.c.l.b16 %v75
    %v363 = vunpack.c.h.b16 %v75
    %v364 = vunpack.c.l.b16 %v76
    %v365 = vunpack.c.h.b16 %v76
    %v366 = vunpack.c.l.b16 %v77
    %v367 = vunpack.c.h.b16 %v77
    %v368 = vunpack.c.l.b16 %v78
    %v369 = vunpack.c.h.b16 %v78
    %v370 = vunpack.c.l.b16 %v79
    %v371 = vunpack.c.h.b16 %v79
    %v372 = vunpack.c.l.b16 %v80
    %v373 = vunpack.c.h.b16 %v80
    %v374 = vunpack.c.l.b16 %v81
    %v375 = vunpack.c.h.b16 %v81
    %v376 = vunpack.c.l.b16 %v82
    %v377 = vunpack.c.h.b16 %v82
    %v378 = vunpack.c.l.b16 %v83
    %v379 = vunpack.c.h.b16 %v83
    %v380 = vunpack.c.l.b16 %v84
    %v381 = vunpack.c.h.b16 %v84
    %v382 = vunpack.c.l.b16 %v85
    %v383 = vunpack.c.h.b16 %v85
    %v384 = vunpack.c.l.b16 %v86
    %v385 = vunpack.c.h.b16 %v86
    %v386 = vunpack.c.l.b16 %v87
    %v387 = vunpack.c.h.b16 %v87
    %v388 = vunpack.c.l.b16 %v88
    %v389 = vunpack.c.h.b16 %v88
    %v390 = vunpack.c.l.b16 %v89
    %v391 = vunpack.c.h.b16 %v89
    %v392 = vunpack.c.l.b16 %v90
    %v393 = vunpack.c.h.b16 %v90
    %v394 = vunpack.c.l.b16 %v91
    %v395 = vunpack.c.h.b16 %v91
    %v396 = vunpack.c.l.b16 %v92
    %v397 = vunpack.c.h.b16 %v92
    %v398 = vunpack.c.l.b16 %v93
    %v399 = vunpack.c.h.b16 %v93
    %v400 = vunpack.c.l.b16 %v94
    %v401 = vunpack.c.h.b16 %v94
    %v402 = vunpack.c.l.b16 %v95
    %v403 = vunpack.c.h.b16 %v95
    %v404 = vunpack.c.l.b16 %v96
    %v405 = vunpack.c.h.b16 %v96
    %v406 = vunpack.c.l.b16 %v97
    %v407 = vunpack.c.h.b16 %v97
    %v408 = vunpack.c.l.b16 %v98
    %v409 = vunpack.c.h.b16 %v98
    %v410 = vunpack.c.l.b16 %v99
    %v411 = vunpack.c.h.b16 %v99
    %v412 = vunpack.c.l.b16 %v100
    %v413 = vunpack.c.h.b16 %v100
    %v414 = vunpack.c.l.b16 %v101
    %v415 = vunpack.c.h.b16 %v101
    %v416 = vunpack.c.l.b16 %v102
    %v417 = vunpack.c.h.b16 %v102
    %v418 = vunpack.c.l.b16 %v103
    %v419 = vunpack.c.h.b16 %v103
    %v420 = vunpack.c.l.b16 %v104
    %v421 = vunpack.c.h.b16 %v104
    %v422 = vunpack.c.l.b16 %v105
    %v423 = vunpack.c.h.b16 %v105
    %v424 = vunpack.c.l.b16 %v106
    %v425 = vunpack.c.h.b16 %v106
    %v426 = vunpack.c.l.b16 %v107
    %v427 = vunpack.c.h.b16 %v107
    %v428 = vunpack.c.l.b16 %v108
    %v429 = vunpack.c.h.b16 %v108
    %v430 = vunpack.c.l.b16 %v109
    %v431 = vunpack.c.h.b16 %v109
    %v432 = vunpack.c.l.b16 %v110
    %v433 = vunpack.c.h.b16 %v110
    %v434 = vunpack.c.l.b16 %v111
    %v435 = vunpack.c.h.b16 %v111
    %v436 = vunpack.c.l.b16 %v112
    %v437 = vunpack.c.h.b16 %v112
    %v438 = vunpack.c.l.b16 %v113
    %v439 = vunpack.c.h.b16 %v113
    %v440 = vunpack.c.l.b16 %v114
    %v441 = vunpack.c.h.b16 %v114
    %v442 = vunpack.c.l.b16 %v115
    %v443 = vunpack.c.h.b16 %v115
    %v444 = vunpack.c.l.b16 %v116
    %v445 = vunpack.c.h.b16 %v116
    %v446 = vunpack.c.l.b16 %v117
    %v447 = vunpack.c.h.b16 %v117
    %v448 = vunpack.c.l.b16 %v118
    %v449 = vunpack.c.h.b16 %v118
    %v450 = vunpack.c.l.b16 %v119
    %v451 = vunpack.c.h.b16 %v119
    %v452 = vunpack.c.l.b16 %v120
    %v453 = vunpack.c.h.b16 %v120
    %v454 = vunpack.c.l.b16 %v121
    %v455 = vunpack.c.h.b16 %v121
    %v456 = vunpack.c.l.b16 %v122
    %v457 = vunpack.c.h.b16 %v122
    %v458 = vunpack.c.l.b16 %v123
    %v459 = vunpack.c.h.b16 %v123
    %v460 = vpack.c.b16 %v396, %v332
    %v461 = vpack.c.b16 %v397, %v333
    %v462 = vpack.c.b16 %v398, %v334
    %v463 = vpack.c.b16 %v399, %v335
    %v464 = vpack.c.b16 %v400, %v336
    %v465 = vpack.c.b16 %v401, %v337
    %v466 = vpack.c.b16 %v402, %v338
    %v467 = vpack.c.b16 %v403, %v339
    %v468 = vpack.c.b16 %v404, %v340
    %v469 = vpack.c.b16 %v405, %v341
    %v470 = vpack.c.b16 %v406, %v342
    %v471 = vpack.c.b16 %v407, %v343
    %v472 = vpack.c.b16 %v408, %v344
    %v473 = vpack.c.b16 %v409, %v345
    %v474 = vpack.c.b16 %v410, %v346
    %v475 = vpack.c.b16 %v411, %v347
    %v476 = vpack.c.b16 %v412, %v348
    %v477 = vpack.c.b16 %v413, %v349
    %v478 = vpack.c.b16 %v414, %v350
    %v479 = vpack.c.b16 %v415, %v351
    %v480 = vpack.c.b16 %v416, %v352
    %v481 = vpack.c.b16 %v417, %v353
    %v482 = vpack.c.b16 %v418, %v354
    %v483 = vpack.c.b16 %v419, %v355
    %v484 = vpack.c.b16 %v420, %v356
    %v485 = vpack.c.b16 %v421, %v357
    %v486 = vpack.c.b16 %v422, %v358
    %v487 = vpack.c.b16 %v423, %v359
    %v488 = vpack.c.b16 %v424, %v360
    %v489 = vpack.c.b16 %v425, %v361
    %v490 = vpack.c.b16 %v426, %v362
    %v491 = vpack.c.b16 %v427, %v363
    %v492 = vpack.c.b16 %v428, %v364
    %v493 = vpack.c.b16 %v429, %v365
    %v494 = vpack.c.b16 %v430, %v366
    %v495 = vpack.c.b16 %v431, %v367
    %v496 = vpack.c.b16 %v432, %v368
    %v497 = vpack.c.b16 %v433, %v369
    %v498 = vpack.c.b16 %v434, %v370
    %v499 = vpack.c.b16 %v435, %v371
    %v500 = vpack.c.b16 %v436, %v372
    %v501 = vpack.c.b16 %v437, %v373
    %v502 = vpack.c.b16 %v438, %v374
    %v503 = vpack.c.b16 %v439, %v375
    %v504 = vpack.c.b16 %v440, %v376
    %v505 = vpack.c.b16 %v441, %v377
    %v506 = vpack.c.b16 %v442, %v378
    %v507 = vpack.c.b16 %v443, %v379
    %v508 = vpack.c.b16 %v444, %v380
    %v509 = vpack.c.b16 %v445, %v381
    %v510 = vpack.c.b16 %v446, %v382
    %v511 = vpack.c.b16 %v447, %v383
    %v512 = vpack.c.b16 %v448, %v384
    %v513 = vpack.c.b16 %v449, %v385
    %v514 = vpack.c.b16 %v450, %v386
    %v515 = vpack.c.b16 %v451, %v387
    %v516 = vpack.c.b16 %v452, %v388
    %v517 = vpack.c.b16 %v453, %v389
    %v518 = vpack.c.b16 %v454, %v390
    %v519 = vpack.c.b16 %v455, %v391
    %v520 = vpack.c.b16 %v456, %v392
    %v521 = vpack.c.b16 %v457, %v393
    %v522 = vpack.c.b16 %v458, %v394
    %v523 = vpack.c.b16 %v459, %v395
    %vm588 = vcmask 130048
    %v590 = vsel %vm588, %v59, 0
    %592 = vmatpush.bf16.msra.mxu0 0
    %593 = vmatpush.bf16.msra.mxu0 0
    %594 = vmatpush.bf16.msra.mxu0 0
    %595 = vmatpush.bf16.msra.mxu0 0
    %596 = vmatpush.bf16.msra.mxu0 0
    %597 = vmatpush.bf16.msra.mxu0 0
    %598 = vmatpush.bf16.msra.mxu0 0
    %599 = vmatpush.bf16.msra.mxu0 %v460
    %600 = vmatmul.bf16.gmra.mxu0 %v590
    %v601 = vpop.f32.mrf.mxu0
    %v602 = vadd.f32 %v140, %v601
    %v603 = vpop.f32.mrf.mxu0
    %604 = vdwg.mxu0
    %605 = vmatpush.bf16.msra.mxu0 0
    %606 = vmatpush.bf16.msra.mxu0 0
    %607 = vmatpush.bf16.msra.mxu0 0
    %608 = vmatpush.bf16.msra.mxu0 0
    %609 = vmatpush.bf16.msra.mxu0 0
    %610 = vmatpush.bf16.msra.mxu0 0
    %611 = vmatpush.bf16.msra.mxu0 0
    %612 = vmatpush.bf16.msra.mxu0 %v461
    %613 = vmatmul.bf16.gmra.mxu0 %v590
    %v614 = vpop.f32.mrf.mxu0
    %v615 = vadd.f32 %v141, %v614
    %v616 = vpop.f32.mrf.mxu0
    %617 = vdwg.mxu0
    %618 = vmatpush.bf16.msra.mxu0 0
    %619 = vmatpush.bf16.msra.mxu0 0
    %620 = vmatpush.bf16.msra.mxu0 0
    %621 = vmatpush.bf16.msra.mxu0 0
    %622 = vmatpush.bf16.msra.mxu0 0
    %623 = vmatpush.bf16.msra.mxu0 0
    %624 = vmatpush.bf16.msra.mxu0 0
    %625 = vmatpush.bf16.msra.mxu0 %v462
    %626 = vmatmul.bf16.gmra.mxu0 %v590
    %v627 = vpop.f32.mrf.mxu0
    %v628 = vadd.f32 %v142, %v627
    %v629 = vpop.f32.mrf.mxu0
    %630 = vdwg.mxu0
    %631 = vmatpush.bf16.msra.mxu0 0
    %632 = vmatpush.bf16.msra.mxu0 0
    %633 = vmatpush.bf16.msra.mxu0 0
    %634 = vmatpush.bf16.msra.mxu0 0
    %635 = vmatpush.bf16.msra.mxu0 0
    %636 = vmatpush.bf16.msra.mxu0 0
    %637 = vmatpush.bf16.msra.mxu0 0
    %638 = vmatpush.bf16.msra.mxu0 %v463
    %639 = vmatmul.bf16.gmra.mxu0 %v590
    %v640 = vpop.f32.mrf.mxu0
    %v641 = vadd.f32 %v143, %v640
    %v642 = vpop.f32.mrf.mxu0
    %643 = vdwg.mxu0
    %644 = vmatpush.bf16.msra.mxu0 0
    %645 = vmatpush.bf16.msra.mxu0 0
    %646 = vmatpush.bf16.msra.mxu0 0
    %647 = vmatpush.bf16.msra.mxu0 0
    %648 = vmatpush.bf16.msra.mxu0 0
    %649 = vmatpush.bf16.msra.mxu0 0
    %650 = vmatpush.bf16.msra.mxu0 0
    %651 = vmatpush.bf16.msra.mxu0 %v464
    %652 = vmatmul.bf16.gmra.mxu0 %v590
    %v653 = vpop.f32.mrf.mxu0
    %v654 = vadd.f32 %v144, %v653
    %v655 = vpop.f32.mrf.mxu0
    %656 = vdwg.mxu0
    %657 = vmatpush.bf16.msra.mxu0 0
    %658 = vmatpush.bf16.msra.mxu0 0
    %659 = vmatpush.bf16.msra.mxu0 0
    %660 = vmatpush.bf16.msra.mxu0 0
    %661 = vmatpush.bf16.msra.mxu0 0
    %662 = vmatpush.bf16.msra.mxu0 0
    %663 = vmatpush.bf16.msra.mxu0 0
    %664 = vmatpush.bf16.msra.mxu0 %v465
    %665 = vmatmul.bf16.gmra.mxu0 %v590
    %v666 = vpop.f32.mrf.mxu0
    %v667 = vadd.f32 %v145, %v666
    %v668 = vpop.f32.mrf.mxu0
    %669 = vdwg.mxu0
    %670 = vmatpush.bf16.msra.mxu0 0
    %671 = vmatpush.bf16.msra.mxu0 0
    %672 = vmatpush.bf16.msra.mxu0 0
    %673 = vmatpush.bf16.msra.mxu0 0
    %674 = vmatpush.bf16.msra.mxu0 0
    %675 = vmatpush.bf16.msra.mxu0 0
    %676 = vmatpush.bf16.msra.mxu0 0
    %677 = vmatpush.bf16.msra.mxu0 %v466
    %678 = vmatmul.bf16.gmra.mxu0 %v590
    %v679 = vpop.f32.mrf.mxu0
    %v680 = vadd.f32 %v146, %v679
    %v681 = vpop.f32.mrf.mxu0
    %682 = vdwg.mxu0
    %683 = vmatpush.bf16.msra.mxu0 0
    %684 = vmatpush.bf16.msra.mxu0 0
    %685 = vmatpush.bf16.msra.mxu0 0
    %686 = vmatpush.bf16.msra.mxu0 0
    %687 = vmatpush.bf16.msra.mxu0 0
    %688 = vmatpush.bf16.msra.mxu0 0
    %689 = vmatpush.bf16.msra.mxu0 0
    %690 = vmatpush.bf16.msra.mxu0 %v467
    %691 = vmatmul.bf16.gmra.mxu0 %v590
    %v692 = vpop.f32.mrf.mxu0
    %v693 = vadd.f32 %v147, %v692
    %v694 = vpop.f32.mrf.mxu0
    %695 = vdwg.mxu0
    %696 = vmatpush.bf16.msra.mxu0 0
    %697 = vmatpush.bf16.msra.mxu0 0
    %698 = vmatpush.bf16.msra.mxu0 0
    %699 = vmatpush.bf16.msra.mxu0 0
    %700 = vmatpush.bf16.msra.mxu0 0
    %701 = vmatpush.bf16.msra.mxu0 0
    %702 = vmatpush.bf16.msra.mxu0 0
    %703 = vmatpush.bf16.msra.mxu0 %v468
    %704 = vmatmul.bf16.gmra.mxu0 %v590
    %v705 = vpop.f32.mrf.mxu0
    %v706 = vadd.f32 %v148, %v705
    %v707 = vpop.f32.mrf.mxu0
    %708 = vdwg.mxu0
    %709 = vmatpush.bf16.msra.mxu0 0
    %710 = vmatpush.bf16.msra.mxu0 0
    %711 = vmatpush.bf16.msra.mxu0 0
    %712 = vmatpush.bf16.msra.mxu0 0
    %713 = vmatpush.bf16.msra.mxu0 0
    %714 = vmatpush.bf16.msra.mxu0 0
    %715 = vmatpush.bf16.msra.mxu0 0
    %716 = vmatpush.bf16.msra.mxu0 %v469
    %717 = vmatmul.bf16.gmra.mxu0 %v590
    %v718 = vpop.f32.mrf.mxu0
    %v719 = vadd.f32 %v149, %v718
    %v720 = vpop.f32.mrf.mxu0
    %721 = vdwg.mxu0
    %722 = vmatpush.bf16.msra.mxu0 0
    %723 = vmatpush.bf16.msra.mxu0 0
    %724 = vmatpush.bf16.msra.mxu0 0
    %725 = vmatpush.bf16.msra.mxu0 0
    %726 = vmatpush.bf16.msra.mxu0 0
    %727 = vmatpush.bf16.msra.mxu0 0
    %728 = vmatpush.bf16.msra.mxu0 0
    %729 = vmatpush.bf16.msra.mxu0 %v470
    %730 = vmatmul.bf16.gmra.mxu0 %v590
    %v731 = vpop.f32.mrf.mxu0
    %v732 = vadd.f32 %v150, %v731
    %v733 = vpop.f32.mrf.mxu0
    %734 = vdwg.mxu0
    %735 = vmatpush.bf16.msra.mxu0 0
    %736 = vmatpush.bf16.msra.mxu0 0
    %737 = vmatpush.bf16.msra.mxu0 0
    %738 = vmatpush.bf16.msra.mxu0 0
    %739 = vmatpush.bf16.msra.mxu0 0
    %740 = vmatpush.bf16.msra.mxu0 0
    %741 = vmatpush.bf16.msra.mxu0 0
    %742 = vmatpush.bf16.msra.mxu0 %v471
    %743 = vmatmul.bf16.gmra.mxu0 %v590
    %v744 = vpop.f32.mrf.mxu0
    %v745 = vadd.f32 %v151, %v744
    %v746 = vpop.f32.mrf.mxu0
    %747 = vdwg.mxu0
    %748 = vmatpush.bf16.msra.mxu0 0
    %749 = vmatpush.bf16.msra.mxu0 0
    %750 = vmatpush.bf16.msra.mxu0 0
    %751 = vmatpush.bf16.msra.mxu0 0
    %752 = vmatpush.bf16.msra.mxu0 0
    %753 = vmatpush.bf16.msra.mxu0 0
    %754 = vmatpush.bf16.msra.mxu0 0
    %755 = vmatpush.bf16.msra.mxu0 %v472
    %756 = vmatmul.bf16.gmra.mxu0 %v590
    %v757 = vpop.f32.mrf.mxu0
    %v758 = vadd.f32 %v152, %v757
    %v759 = vpop.f32.mrf.mxu0
    %760 = vdwg.mxu0
    %761 = vmatpush.bf16.msra.mxu0 0
    %762 = vmatpush.bf16.msra.mxu0 0
    %763 = vmatpush.bf16.msra.mxu0 0
    %764 = vmatpush.bf16.msra.mxu0 0
    %765 = vmatpush.bf16.msra.mxu0 0
    %766 = vmatpush.bf16.msra.mxu0 0
    %767 = vmatpush.bf16.msra.mxu0 0
    %768 = vmatpush.bf16.msra.mxu0 %v473
    %769 = vmatmul.bf16.gmra.mxu0 %v590
    %v770 = vpop.f32.mrf.mxu0
    %v771 = vadd.f32 %v153, %v770
    %v772 = vpop.f32.mrf.mxu0
    %773 = vdwg.mxu0
    %774 = vmatpush.bf16.msra.mxu0 0
    %775 = vmatpush.bf16.msra.mxu0 0
    %776 = vmatpush.bf16.msra.mxu0 0
    %777 = vmatpush.bf16.msra.mxu0 0
    %778 = vmatpush.bf16.msra.mxu0 0
    %779 = vmatpush.bf16.msra.mxu0 0
    %780 = vmatpush.bf16.msra.mxu0 0
    %781 = vmatpush.bf16.msra.mxu0 %v474
    %782 = vmatmul.bf16.gmra.mxu0 %v590
    %v783 = vpop.f32.mrf.mxu0
    %v784 = vadd.f32 %v154, %v783
    %v785 = vpop.f32.mrf.mxu0
    %786 = vdwg.mxu0
    %787 = vmatpush.bf16.msra.mxu0 0
    %788 = vmatpush.bf16.msra.mxu0 0
    %789 = vmatpush.bf16.msra.mxu0 0
    %790 = vmatpush.bf16.msra.mxu0 0
    %791 = vmatpush.bf16.msra.mxu0 0
    %792 = vmatpush.bf16.msra.mxu0 0
    %793 = vmatpush.bf16.msra.mxu0 0
    %794 = vmatpush.bf16.msra.mxu0 %v475
    %795 = vmatmul.bf16.gmra.mxu0 %v590
    %v796 = vpop.f32.mrf.mxu0
    %v797 = vadd.f32 %v155, %v796
    %v798 = vpop.f32.mrf.mxu0
    %799 = vdwg.mxu0
    %800 = vmatpush.bf16.msra.mxu0 0
    %801 = vmatpush.bf16.msra.mxu0 0
    %802 = vmatpush.bf16.msra.mxu0 0
    %803 = vmatpush.bf16.msra.mxu0 0
    %804 = vmatpush.bf16.msra.mxu0 0
    %805 = vmatpush.bf16.msra.mxu0 0
    %806 = vmatpush.bf16.msra.mxu0 0
    %807 = vmatpush.bf16.msra.mxu0 %v476
    %808 = vmatmul.bf16.gmra.mxu0 %v590
    %v809 = vpop.f32.mrf.mxu0
    %v810 = vadd.f32 %v156, %v809
    %v811 = vpop.f32.mrf.mxu0
    %812 = vdwg.mxu0
    %813 = vmatpush.bf16.msra.mxu0 0
    %814 = vmatpush.bf16.msra.mxu0 0
    %815 = vmatpush.bf16.msra.mxu0 0
    %816 = vmatpush.bf16.msra.mxu0 0
    %817 = vmatpush.bf16.msra.mxu0 0
    %818 = vmatpush.bf16.msra.mxu0 0
    %819 = vmatpush.bf16.msra.mxu0 0
    %820 = vmatpush.bf16.msra.mxu0 %v477
    %821 = vmatmul.bf16.gmra.mxu0 %v590
    %v822 = vpop.f32.mrf.mxu0
    %v823 = vadd.f32 %v157, %v822
    %v824 = vpop.f32.mrf.mxu0
    %825 = vdwg.mxu0
    %826 = vmatpush.bf16.msra.mxu0 0
    %827 = vmatpush.bf16.msra.mxu0 0
    %828 = vmatpush.bf16.msra.mxu0 0
    %829 = vmatpush.bf16.msra.mxu0 0
    %830 = vmatpush.bf16.msra.mxu0 0
    %831 = vmatpush.bf16.msra.mxu0 0
    %832 = vmatpush.bf16.msra.mxu0 0
    %833 = vmatpush.bf16.msra.mxu0 %v478
    %834 = vmatmul.bf16.gmra.mxu0 %v590
    %v835 = vpop.f32.mrf.mxu0
    %v836 = vadd.f32 %v158, %v835
    %v837 = vpop.f32.mrf.mxu0
    %838 = vdwg.mxu0
    %839 = vmatpush.bf16.msra.mxu0 0
    %840 = vmatpush.bf16.msra.mxu0 0
    %841 = vmatpush.bf16.msra.mxu0 0
    %842 = vmatpush.bf16.msra.mxu0 0
    %843 = vmatpush.bf16.msra.mxu0 0
    %844 = vmatpush.bf16.msra.mxu0 0
    %845 = vmatpush.bf16.msra.mxu0 0
    %846 = vmatpush.bf16.msra.mxu0 %v479
    %847 = vmatmul.bf16.gmra.mxu0 %v590
    %v848 = vpop.f32.mrf.mxu0
    %v849 = vadd.f32 %v159, %v848
    %v850 = vpop.f32.mrf.mxu0
    %851 = vdwg.mxu0
    %852 = vmatpush.bf16.msra.mxu0 0
    %853 = vmatpush.bf16.msra.mxu0 0
    %854 = vmatpush.bf16.msra.mxu0 0
    %855 = vmatpush.bf16.msra.mxu0 0
    %856 = vmatpush.bf16.msra.mxu0 0
    %857 = vmatpush.bf16.msra.mxu0 0
    %858 = vmatpush.bf16.msra.mxu0 0
    %859 = vmatpush.bf16.msra.mxu0 %v480
    %860 = vmatmul.bf16.gmra.mxu0 %v590
    %v861 = vpop.f32.mrf.mxu0
    %v862 = vadd.f32 %v160, %v861
    %v863 = vpop.f32.mrf.mxu0
    %864 = vdwg.mxu0
    %865 = vmatpush.bf16.msra.mxu0 0
    %866 = vmatpush.bf16.msra.mxu0 0
    %867 = vmatpush.bf16.msra.mxu0 0
    %868 = vmatpush.bf16.msra.mxu0 0
    %869 = vmatpush.bf16.msra.mxu0 0
    %870 = vmatpush.bf16.msra.mxu0 0
    %871 = vmatpush.bf16.msra.mxu0 0
    %872 = vmatpush.bf16.msra.mxu0 %v481
    %873 = vmatmul.bf16.gmra.mxu0 %v590
    %v874 = vpop.f32.mrf.mxu0
    %v875 = vadd.f32 %v161, %v874
    %v876 = vpop.f32.mrf.mxu0
    %877 = vdwg.mxu0
    %878 = vmatpush.bf16.msra.mxu0 0
    %879 = vmatpush.bf16.msra.mxu0 0
    %880 = vmatpush.bf16.msra.mxu0 0
    %881 = vmatpush.bf16.msra.mxu0 0
    %882 = vmatpush.bf16.msra.mxu0 0
    %883 = vmatpush.bf16.msra.mxu0 0
    %884 = vmatpush.bf16.msra.mxu0 0
    %885 = vmatpush.bf16.msra.mxu0 %v482
    %886 = vmatmul.bf16.gmra.mxu0 %v590
    %v887 = vpop.f32.mrf.mxu0
    %v888 = vadd.f32 %v162, %v887
    %v889 = vpop.f32.mrf.mxu0
    %890 = vdwg.mxu0
    %891 = vmatpush.bf16.msra.mxu0 0
    %892 = vmatpush.bf16.msra.mxu0 0
    %893 = vmatpush.bf16.msra.mxu0 0
    %894 = vmatpush.bf16.msra.mxu0 0
    %895 = vmatpush.bf16.msra.mxu0 0
    %896 = vmatpush.bf16.msra.mxu0 0
    %897 = vmatpush.bf16.msra.mxu0 0
    %898 = vmatpush.bf16.msra.mxu0 %v483
    %899 = vmatmul.bf16.gmra.mxu0 %v590
    %v900 = vpop.f32.mrf.mxu0
    %v901 = vadd.f32 %v163, %v900
    %v902 = vpop.f32.mrf.mxu0
    %903 = vdwg.mxu0
    %904 = vmatpush.bf16.msra.mxu0 0
    %905 = vmatpush.bf16.msra.mxu0 0
    %906 = vmatpush.bf16.msra.mxu0 0
    %907 = vmatpush.bf16.msra.mxu0 0
    %908 = vmatpush.bf16.msra.mxu0 0
    %909 = vmatpush.bf16.msra.mxu0 0
    %910 = vmatpush.bf16.msra.mxu0 0
    %911 = vmatpush.bf16.msra.mxu0 %v484
    %912 = vmatmul.bf16.gmra.mxu0 %v590
    %v913 = vpop.f32.mrf.mxu0
    %v914 = vadd.f32 %v164, %v913
    %v915 = vpop.f32.mrf.mxu0
    %916 = vdwg.mxu0
    %917 = vmatpush.bf16.msra.mxu0 0
    %918 = vmatpush.bf16.msra.mxu0 0
    %919 = vmatpush.bf16.msra.mxu0 0
    %920 = vmatpush.bf16.msra.mxu0 0
    %921 = vmatpush.bf16.msra.mxu0 0
    %922 = vmatpush.bf16.msra.mxu0 0
    %923 = vmatpush.bf16.msra.mxu0 0
    %924 = vmatpush.bf16.msra.mxu0 %v485
    %925 = vmatmul.bf16.gmra.mxu0 %v590
    %v926 = vpop.f32.mrf.mxu0
    %v927 = vadd.f32 %v165, %v926
    %v928 = vpop.f32.mrf.mxu0
    %929 = vdwg.mxu0
    %930 = vmatpush.bf16.msra.mxu0 0
    %931 = vmatpush.bf16.msra.mxu0 0
    %932 = vmatpush.bf16.msra.mxu0 0
    %933 = vmatpush.bf16.msra.mxu0 0
    %934 = vmatpush.bf16.msra.mxu0 0
    %935 = vmatpush.bf16.msra.mxu0 0
    %936 = vmatpush.bf16.msra.mxu0 0
    %937 = vmatpush.bf16.msra.mxu0 %v486
    %938 = vmatmul.bf16.gmra.mxu0 %v590
    %v939 = vpop.f32.mrf.mxu0
    %v940 = vadd.f32 %v166, %v939
    %v941 = vpop.f32.mrf.mxu0
    %942 = vdwg.mxu0
    %943 = vmatpush.bf16.msra.mxu0 0
    %944 = vmatpush.bf16.msra.mxu0 0
    %945 = vmatpush.bf16.msra.mxu0 0
    %946 = vmatpush.bf16.msra.mxu0 0
    %947 = vmatpush.bf16.msra.mxu0 0
    %948 = vmatpush.bf16.msra.mxu0 0
    %949 = vmatpush.bf16.msra.mxu0 0
    %950 = vmatpush.bf16.msra.mxu0 %v487
    %951 = vmatmul.bf16.gmra.mxu0 %v590
    %v952 = vpop.f32.mrf.mxu0
    %v953 = vadd.f32 %v167, %v952
    %v954 = vpop.f32.mrf.mxu0
    %955 = vdwg.mxu0
    %956 = vmatpush.bf16.msra.mxu0 0
    %957 = vmatpush.bf16.msra.mxu0 0
    %958 = vmatpush.bf16.msra.mxu0 0
    %959 = vmatpush.bf16.msra.mxu0 0
    %960 = vmatpush.bf16.msra.mxu0 0
    %961 = vmatpush.bf16.msra.mxu0 0
    %962 = vmatpush.bf16.msra.mxu0 0
    %963 = vmatpush.bf16.msra.mxu0 %v488
    %964 = vmatmul.bf16.gmra.mxu0 %v590
    %v965 = vpop.f32.mrf.mxu0
    %v966 = vadd.f32 %v168, %v965
    %v967 = vpop.f32.mrf.mxu0
    %968 = vdwg.mxu0
    %969 = vmatpush.bf16.msra.mxu0 0
    %970 = vmatpush.bf16.msra.mxu0 0
    %971 = vmatpush.bf16.msra.mxu0 0
    %972 = vmatpush.bf16.msra.mxu0 0
    %973 = vmatpush.bf16.msra.mxu0 0
    %974 = vmatpush.bf16.msra.mxu0 0
    %975 = vmatpush.bf16.msra.mxu0 0
    %976 = vmatpush.bf16.msra.mxu0 %v489
    %977 = vmatmul.bf16.gmra.mxu0 %v590
    %v978 = vpop.f32.mrf.mxu0
    %v979 = vadd.f32 %v169, %v978
    %v980 = vpop.f32.mrf.mxu0
    %981 = vdwg.mxu0
    %982 = vmatpush.bf16.msra.mxu0 0
    %983 = vmatpush.bf16.msra.mxu0 0
    %984 = vmatpush.bf16.msra.mxu0 0
    %985 = vmatpush.bf16.msra.mxu0 0
    %986 = vmatpush.bf16.msra.mxu0 0
    %987 = vmatpush.bf16.msra.mxu0 0
    %988 = vmatpush.bf16.msra.mxu0 0
    %989 = vmatpush.bf16.msra.mxu0 %v490
    %990 = vmatmul.bf16.gmra.mxu0 %v590
    %v991 = vpop.f32.mrf.mxu0
    %v992 = vadd.f32 %v170, %v991
    %v993 = vpop.f32.mrf.mxu0
    %994 = vdwg.mxu0
    %995 = vmatpush.bf16.msra.mxu0 0
    %996 = vmatpush.bf16.msra.mxu0 0
    %997 = vmatpush.bf16.msra.mxu0 0
    %998 = vmatpush.bf16.msra.mxu0 0
    %999 = vmatpush.bf16.msra.mxu0 0
    %1000 = vmatpush.bf16.msra.mxu0 0
    %1001 = vmatpush.bf16.msra.mxu0 0
    %1002 = vmatpush.bf16.msra.mxu0 %v491
    %1003 = vmatmul.bf16.gmra.mxu0 %v590
    %v1004 = vpop.f32.mrf.mxu0
    %v1005 = vadd.f32 %v171, %v1004
    %v1006 = vpop.f32.mrf.mxu0
    %1007 = vdwg.mxu0
    %1008 = vmatpush.bf16.msra.mxu0 0
    %1009 = vmatpush.bf16.msra.mxu0 0
    %1010 = vmatpush.bf16.msra.mxu0 0
    %1011 = vmatpush.bf16.msra.mxu0 0
    %1012 = vmatpush.bf16.msra.mxu0 0
    %1013 = vmatpush.bf16.msra.mxu0 0
    %1014 = vmatpush.bf16.msra.mxu0 0
    %1015 = vmatpush.bf16.msra.mxu0 %v492
    %1016 = vmatmul.bf16.gmra.mxu0 %v590
    %v1017 = vpop.f32.mrf.mxu0
    %v1018 = vadd.f32 %v172, %v1017
    %v1019 = vpop.f32.mrf.mxu0
    %1020 = vdwg.mxu0
    %1021 = vmatpush.bf16.msra.mxu0 0
    %1022 = vmatpush.bf16.msra.mxu0 0
    %1023 = vmatpush.bf16.msra.mxu0 0
    %1024 = vmatpush.bf16.msra.mxu0 0
    %1025 = vmatpush.bf16.msra.mxu0 0
    %1026 = vmatpush.bf16.msra.mxu0 0
    %1027 = vmatpush.bf16.msra.mxu0 0
    %1028 = vmatpush.bf16.msra.mxu0 %v493
    %1029 = vmatmul.bf16.gmra.mxu0 %v590
    %v1030 = vpop.f32.mrf.mxu0
    %v1031 = vadd.f32 %v173, %v1030
    %v1032 = vpop.f32.mrf.mxu0
    %1033 = vdwg.mxu0
    %1034 = vmatpush.bf16.msra.mxu0 0
    %1035 = vmatpush.bf16.msra.mxu0 0
    %1036 = vmatpush.bf16.msra.mxu0 0
    %1037 = vmatpush.bf16.msra.mxu0 0
    %1038 = vmatpush.bf16.msra.mxu0 0
    %1039 = vmatpush.bf16.msra.mxu0 0
    %1040 = vmatpush.bf16.msra.mxu0 0
    %1041 = vmatpush.bf16.msra.mxu0 %v494
    %1042 = vmatmul.bf16.gmra.mxu0 %v590
    %v1043 = vpop.f32.mrf.mxu0
    %v1044 = vadd.f32 %v174, %v1043
    %v1045 = vpop.f32.mrf.mxu0
    %1046 = vdwg.mxu0
    %1047 = vmatpush.bf16.msra.mxu0 0
    %1048 = vmatpush.bf16.msra.mxu0 0
    %1049 = vmatpush.bf16.msra.mxu0 0
    %1050 = vmatpush.bf16.msra.mxu0 0
    %1051 = vmatpush.bf16.msra.mxu0 0
    %1052 = vmatpush.bf16.msra.mxu0 0
    %1053 = vmatpush.bf16.msra.mxu0 0
    %1054 = vmatpush.bf16.msra.mxu0 %v495
    %1055 = vmatmul.bf16.gmra.mxu0 %v590
    %v1056 = vpop.f32.mrf.mxu0
    %v1057 = vadd.f32 %v175, %v1056
    %v1058 = vpop.f32.mrf.mxu0
    %1059 = vdwg.mxu0
    %1060 = vmatpush.bf16.msra.mxu0 0
    %1061 = vmatpush.bf16.msra.mxu0 0
    %1062 = vmatpush.bf16.msra.mxu0 0
    %1063 = vmatpush.bf16.msra.mxu0 0
    %1064 = vmatpush.bf16.msra.mxu0 0
    %1065 = vmatpush.bf16.msra.mxu0 0
    %1066 = vmatpush.bf16.msra.mxu0 0
    %1067 = vmatpush.bf16.msra.mxu0 %v496
    %1068 = vmatmul.bf16.gmra.mxu0 %v590
    %v1069 = vpop.f32.mrf.mxu0
    %v1070 = vadd.f32 %v176, %v1069
    %v1071 = vpop.f32.mrf.mxu0
    %1072 = vdwg.mxu0
    %1073 = vmatpush.bf16.msra.mxu0 0
    %1074 = vmatpush.bf16.msra.mxu0 0
    %1075 = vmatpush.bf16.msra.mxu0 0
    %1076 = vmatpush.bf16.msra.mxu0 0
    %1077 = vmatpush.bf16.msra.mxu0 0
    %1078 = vmatpush.bf16.msra.mxu0 0
    %1079 = vmatpush.bf16.msra.mxu0 0
    %1080 = vmatpush.bf16.msra.mxu0 %v497
    %1081 = vmatmul.bf16.gmra.mxu0 %v590
    %v1082 = vpop.f32.mrf.mxu0
    %v1083 = vadd.f32 %v177, %v1082
    %v1084 = vpop.f32.mrf.mxu0
    %1085 = vdwg.mxu0
    %1086 = vmatpush.bf16.msra.mxu0 0
    %1087 = vmatpush.bf16.msra.mxu0 0
    %1088 = vmatpush.bf16.msra.mxu0 0
    %1089 = vmatpush.bf16.msra.mxu0 0
    %1090 = vmatpush.bf16.msra.mxu0 0
    %1091 = vmatpush.bf16.msra.mxu0 0
    %1092 = vmatpush.bf16.msra.mxu0 0
    %1093 = vmatpush.bf16.msra.mxu0 %v498
    %1094 = vmatmul.bf16.gmra.mxu0 %v590
    %v1095 = vpop.f32.mrf.mxu0
    %v1096 = vadd.f32 %v178, %v1095
    %v1097 = vpop.f32.mrf.mxu0
    %1098 = vdwg.mxu0
    %1099 = vmatpush.bf16.msra.mxu0 0
    %1100 = vmatpush.bf16.msra.mxu0 0
    %1101 = vmatpush.bf16.msra.mxu0 0
    %1102 = vmatpush.bf16.msra.mxu0 0
    %1103 = vmatpush.bf16.msra.mxu0 0
    %1104 = vmatpush.bf16.msra.mxu0 0
    %1105 = vmatpush.bf16.msra.mxu0 0
    %1106 = vmatpush.bf16.msra.mxu0 %v499
    %1107 = vmatmul.bf16.gmra.mxu0 %v590
    %v1108 = vpop.f32.mrf.mxu0
    %v1109 = vadd.f32 %v179, %v1108
    %v1110 = vpop.f32.mrf.mxu0
    %1111 = vdwg.mxu0
    %1112 = vmatpush.bf16.msra.mxu0 0
    %1113 = vmatpush.bf16.msra.mxu0 0
    %1114 = vmatpush.bf16.msra.mxu0 0
    %1115 = vmatpush.bf16.msra.mxu0 0
    %1116 = vmatpush.bf16.msra.mxu0 0
    %1117 = vmatpush.bf16.msra.mxu0 0
    %1118 = vmatpush.bf16.msra.mxu0 0
    %1119 = vmatpush.bf16.msra.mxu0 %v500
    %1120 = vmatmul.bf16.gmra.mxu0 %v590
    %v1121 = vpop.f32.mrf.mxu0
    %v1122 = vadd.f32 %v180, %v1121
    %v1123 = vpop.f32.mrf.mxu0
    %1124 = vdwg.mxu0
    %1125 = vmatpush.bf16.msra.mxu0 0
    %1126 = vmatpush.bf16.msra.mxu0 0
    %1127 = vmatpush.bf16.msra.mxu0 0
    %1128 = vmatpush.bf16.msra.mxu0 0
    %1129 = vmatpush.bf16.msra.mxu0 0
    %1130 = vmatpush.bf16.msra.mxu0 0
    %1131 = vmatpush.bf16.msra.mxu0 0
    %1132 = vmatpush.bf16.msra.mxu0 %v501
    %1133 = vmatmul.bf16.gmra.mxu0 %v590
    %v1134 = vpop.f32.mrf.mxu0
    %v1135 = vadd.f32 %v181, %v1134
    %v1136 = vpop.f32.mrf.mxu0
    %1137 = vdwg.mxu0
    %1138 = vmatpush.bf16.msra.mxu0 0
    %1139 = vmatpush.bf16.msra.mxu0 0
    %1140 = vmatpush.bf16.msra.mxu0 0
    %1141 = vmatpush.bf16.msra.mxu0 0
    %1142 = vmatpush.bf16.msra.mxu0 0
    %1143 = vmatpush.bf16.msra.mxu0 0
    %1144 = vmatpush.bf16.msra.mxu0 0
    %1145 = vmatpush.bf16.msra.mxu0 %v502
    %1146 = vmatmul.bf16.gmra.mxu0 %v590
    %v1147 = vpop.f32.mrf.mxu0
    %v1148 = vadd.f32 %v182, %v1147
    %v1149 = vpop.f32.mrf.mxu0
    %1150 = vdwg.mxu0
    %1151 = vmatpush.bf16.msra.mxu0 0
    %1152 = vmatpush.bf16.msra.mxu0 0
    %1153 = vmatpush.bf16.msra.mxu0 0
    %1154 = vmatpush.bf16.msra.mxu0 0
    %1155 = vmatpush.bf16.msra.mxu0 0
    %1156 = vmatpush.bf16.msra.mxu0 0
    %1157 = vmatpush.bf16.msra.mxu0 0
    %1158 = vmatpush.bf16.msra.mxu0 %v503
    %1159 = vmatmul.bf16.gmra.mxu0 %v590
    %v1160 = vpop.f32.mrf.mxu0
    %v1161 = vadd.f32 %v183, %v1160
    %v1162 = vpop.f32.mrf.mxu0
    %1163 = vdwg.mxu0
    %1164 = vmatpush.bf16.msra.mxu0 0
    %1165 = vmatpush.bf16.msra.mxu0 0
    %1166 = vmatpush.bf16.msra.mxu0 0
    %1167 = vmatpush.bf16.msra.mxu0 0
    %1168 = vmatpush.bf16.msra.mxu0 0
    %1169 = vmatpush.bf16.msra.mxu0 0
    %1170 = vmatpush.bf16.msra.mxu0 0
    %1171 = vmatpush.bf16.msra.mxu0 %v504
    %1172 = vmatmul.bf16.gmra.mxu0 %v590
    %v1173 = vpop.f32.mrf.mxu0
    %v1174 = vadd.f32 %v184, %v1173
    %v1175 = vpop.f32.mrf.mxu0
    %1176 = vdwg.mxu0
    %1177 = vmatpush.bf16.msra.mxu0 0
    %1178 = vmatpush.bf16.msra.mxu0 0
    %1179 = vmatpush.bf16.msra.mxu0 0
    %1180 = vmatpush.bf16.msra.mxu0 0
    %1181 = vmatpush.bf16.msra.mxu0 0
    %1182 = vmatpush.bf16.msra.mxu0 0
    %1183 = vmatpush.bf16.msra.mxu0 0
    %1184 = vmatpush.bf16.msra.mxu0 %v505
    %1185 = vmatmul.bf16.gmra.mxu0 %v590
    %v1186 = vpop.f32.mrf.mxu0
    %v1187 = vadd.f32 %v185, %v1186
    %v1188 = vpop.f32.mrf.mxu0
    %1189 = vdwg.mxu0
    %1190 = vmatpush.bf16.msra.mxu0 0
    %1191 = vmatpush.bf16.msra.mxu0 0
    %1192 = vmatpush.bf16.msra.mxu0 0
    %1193 = vmatpush.bf16.msra.mxu0 0
    %1194 = vmatpush.bf16.msra.mxu0 0
    %1195 = vmatpush.bf16.msra.mxu0 0
    %1196 = vmatpush.bf16.msra.mxu0 0
    %1197 = vmatpush.bf16.msra.mxu0 %v506
    %1198 = vmatmul.bf16.gmra.mxu0 %v590
    %v1199 = vpop.f32.mrf.mxu0
    %v1200 = vadd.f32 %v186, %v1199
    %v1201 = vpop.f32.mrf.mxu0
    %1202 = vdwg.mxu0
    %1203 = vmatpush.bf16.msra.mxu0 0
    %1204 = vmatpush.bf16.msra.mxu0 0
    %1205 = vmatpush.bf16.msra.mxu0 0
    %1206 = vmatpush.bf16.msra.mxu0 0
    %1207 = vmatpush.bf16.msra.mxu0 0
    %1208 = vmatpush.bf16.msra.mxu0 0
    %1209 = vmatpush.bf16.msra.mxu0 0
    %1210 = vmatpush.bf16.msra.mxu0 %v507
    %1211 = vmatmul.bf16.gmra.mxu0 %v590
    %v1212 = vpop.f32.mrf.mxu0
    %v1213 = vadd.f32 %v187, %v1212
    %v1214 = vpop.f32.mrf.mxu0
    %1215 = vdwg.mxu0
    %1216 = vmatpush.bf16.msra.mxu0 0
    %1217 = vmatpush.bf16.msra.mxu0 0
    %1218 = vmatpush.bf16.msra.mxu0 0
    %1219 = vmatpush.bf16.msra.mxu0 0
    %1220 = vmatpush.bf16.msra.mxu0 0
    %1221 = vmatpush.bf16.msra.mxu0 0
    %1222 = vmatpush.bf16.msra.mxu0 0
    %1223 = vmatpush.bf16.msra.mxu0 %v508
    %1224 = vmatmul.bf16.gmra.mxu0 %v590
    %v1225 = vpop.f32.mrf.mxu0
    %v1226 = vadd.f32 %v188, %v1225
    %v1227 = vpop.f32.mrf.mxu0
    %1228 = vdwg.mxu0
    %1229 = vmatpush.bf16.msra.mxu0 0
    %1230 = vmatpush.bf16.msra.mxu0 0
    %1231 = vmatpush.bf16.msra.mxu0 0
    %1232 = vmatpush.bf16.msra.mxu0 0
    %1233 = vmatpush.bf16.msra.mxu0 0
    %1234 = vmatpush.bf16.msra.mxu0 0
    %1235 = vmatpush.bf16.msra.mxu0 0
    %1236 = vmatpush.bf16.msra.mxu0 %v509
    %1237 = vmatmul.bf16.gmra.mxu0 %v590
    %v1238 = vpop.f32.mrf.mxu0
    %v1239 = vadd.f32 %v189, %v1238
    %v1240 = vpop.f32.mrf.mxu0
    %1241 = vdwg.mxu0
    %1242 = vmatpush.bf16.msra.mxu0 0
    %1243 = vmatpush.bf16.msra.mxu0 0
    %1244 = vmatpush.bf16.msra.mxu0 0
    %1245 = vmatpush.bf16.msra.mxu0 0
    %1246 = vmatpush.bf16.msra.mxu0 0
    %1247 = vmatpush.bf16.msra.mxu0 0
    %1248 = vmatpush.bf16.msra.mxu0 0
    %1249 = vmatpush.bf16.msra.mxu0 %v510
    %1250 = vmatmul.bf16.gmra.mxu0 %v590
    %v1251 = vpop.f32.mrf.mxu0
    %v1252 = vadd.f32 %v190, %v1251
    %v1253 = vpop.f32.mrf.mxu0
    %1254 = vdwg.mxu0
    %1255 = vmatpush.bf16.msra.mxu0 0
    %1256 = vmatpush.bf16.msra.mxu0 0
    %1257 = vmatpush.bf16.msra.mxu0 0
    %1258 = vmatpush.bf16.msra.mxu0 0
    %1259 = vmatpush.bf16.msra.mxu0 0
    %1260 = vmatpush.bf16.msra.mxu0 0
    %1261 = vmatpush.bf16.msra.mxu0 0
    %1262 = vmatpush.bf16.msra.mxu0 %v511
    %1263 = vmatmul.bf16.gmra.mxu0 %v590
    %v1264 = vpop.f32.mrf.mxu0
    %v1265 = vadd.f32 %v191, %v1264
    %v1266 = vpop.f32.mrf.mxu0
    %1267 = vdwg.mxu0
    %1268 = vmatpush.bf16.msra.mxu0 0
    %1269 = vmatpush.bf16.msra.mxu0 0
    %1270 = vmatpush.bf16.msra.mxu0 0
    %1271 = vmatpush.bf16.msra.mxu0 0
    %1272 = vmatpush.bf16.msra.mxu0 0
    %1273 = vmatpush.bf16.msra.mxu0 0
    %1274 = vmatpush.bf16.msra.mxu0 0
    %1275 = vmatpush.bf16.msra.mxu0 %v512
    %1276 = vmatmul.bf16.gmra.mxu0 %v590
    %v1277 = vpop.f32.mrf.mxu0
    %v1278 = vadd.f32 %v192, %v1277
    %v1279 = vpop.f32.mrf.mxu0
    %1280 = vdwg.mxu0
    %1281 = vmatpush.bf16.msra.mxu0 0
    %1282 = vmatpush.bf16.msra.mxu0 0
    %1283 = vmatpush.bf16.msra.mxu0 0
    %1284 = vmatpush.bf16.msra.mxu0 0
    %1285 = vmatpush.bf16.msra.mxu0 0
    %1286 = vmatpush.bf16.msra.mxu0 0
    %1287 = vmatpush.bf16.msra.mxu0 0
    %1288 = vmatpush.bf16.msra.mxu0 %v513
    %1289 = vmatmul.bf16.gmra.mxu0 %v590
    %v1290 = vpop.f32.mrf.mxu0
    %v1291 = vadd.f32 %v193, %v1290
    %v1292 = vpop.f32.mrf.mxu0
    %1293 = vdwg.mxu0
    %1294 = vmatpush.bf16.msra.mxu0 0
    %1295 = vmatpush.bf16.msra.mxu0 0
    %1296 = vmatpush.bf16.msra.mxu0 0
    %1297 = vmatpush.bf16.msra.mxu0 0
    %1298 = vmatpush.bf16.msra.mxu0 0
    %1299 = vmatpush.bf16.msra.mxu0 0
    %1300 = vmatpush.bf16.msra.mxu0 0
    %1301 = vmatpush.bf16.msra.mxu0 %v514
    %1302 = vmatmul.bf16.gmra.mxu0 %v590
    %v1303 = vpop.f32.mrf.mxu0
    %v1304 = vadd.f32 %v194, %v1303
    %v1305 = vpop.f32.mrf.mxu0
    %1306 = vdwg.mxu0
    %1307 = vmatpush.bf16.msra.mxu0 0
    %1308 = vmatpush.bf16.msra.mxu0 0
    %1309 = vmatpush.bf16.msra.mxu0 0
    %1310 = vmatpush.bf16.msra.mxu0 0
    %1311 = vmatpush.bf16.msra.mxu0 0
    %1312 = vmatpush.bf16.msra.mxu0 0
    %1313 = vmatpush.bf16.msra.mxu0 0
    %1314 = vmatpush.bf16.msra.mxu0 %v515
    %1315 = vmatmul.bf16.gmra.mxu0 %v590
    %v1316 = vpop.f32.mrf.mxu0
    %v1317 = vadd.f32 %v195, %v1316
    %v1318 = vpop.f32.mrf.mxu0
    %1319 = vdwg.mxu0
    %1320 = vmatpush.bf16.msra.mxu0 0
    %1321 = vmatpush.bf16.msra.mxu0 0
    %1322 = vmatpush.bf16.msra.mxu0 0
    %1323 = vmatpush.bf16.msra.mxu0 0
    %1324 = vmatpush.bf16.msra.mxu0 0
    %1325 = vmatpush.bf16.msra.mxu0 0
    %1326 = vmatpush.bf16.msra.mxu0 0
    %1327 = vmatpush.bf16.msra.mxu0 %v516
    %1328 = vmatmul.bf16.gmra.mxu0 %v590
    %v1329 = vpop.f32.mrf.mxu0
    %v1330 = vadd.f32 %v196, %v1329
    %v1331 = vpop.f32.mrf.mxu0
    %1332 = vdwg.mxu0
    %1333 = vmatpush.bf16.msra.mxu0 0
    %1334 = vmatpush.bf16.msra.mxu0 0
    %1335 = vmatpush.bf16.msra.mxu0 0
    %1336 = vmatpush.bf16.msra.mxu0 0
    %1337 = vmatpush.bf16.msra.mxu0 0
    %1338 = vmatpush.bf16.msra.mxu0 0
    %1339 = vmatpush.bf16.msra.mxu0 0
    %1340 = vmatpush.bf16.msra.mxu0 %v517
    %1341 = vmatmul.bf16.gmra.mxu0 %v590
    %v1342 = vpop.f32.mrf.mxu0
    %v1343 = vadd.f32 %v197, %v1342
    %v1344 = vpop.f32.mrf.mxu0
    %1345 = vdwg.mxu0
    %1346 = vmatpush.bf16.msra.mxu0 0
    %1347 = vmatpush.bf16.msra.mxu0 0
    %1348 = vmatpush.bf16.msra.mxu0 0
    %1349 = vmatpush.bf16.msra.mxu0 0
    %1350 = vmatpush.bf16.msra.mxu0 0
    %1351 = vmatpush.bf16.msra.mxu0 0
    %1352 = vmatpush.bf16.msra.mxu0 0
    %1353 = vmatpush.bf16.msra.mxu0 %v518
    %1354 = vmatmul.bf16.gmra.mxu0 %v590
    %v1355 = vpop.f32.mrf.mxu0
    %v1356 = vadd.f32 %v198, %v1355
    %v1357 = vpop.f32.mrf.mxu0
    %1358 = vdwg.mxu0
    %1359 = vmatpush.bf16.msra.mxu0 0
    %1360 = vmatpush.bf16.msra.mxu0 0
    %1361 = vmatpush.bf16.msra.mxu0 0
    %1362 = vmatpush.bf16.msra.mxu0 0
    %1363 = vmatpush.bf16.msra.mxu0 0
    %1364 = vmatpush.bf16.msra.mxu0 0
    %1365 = vmatpush.bf16.msra.mxu0 0
    %1366 = vmatpush.bf16.msra.mxu0 %v519
    %1367 = vmatmul.bf16.gmra.mxu0 %v590
    %v1368 = vpop.f32.mrf.mxu0
    %v1369 = vadd.f32 %v199, %v1368
    %v1370 = vpop.f32.mrf.mxu0
    %1371 = vdwg.mxu0
    %1372 = vmatpush.bf16.msra.mxu0 0
    %1373 = vmatpush.bf16.msra.mxu0 0
    %1374 = vmatpush.bf16.msra.mxu0 0
    %1375 = vmatpush.bf16.msra.mxu0 0
    %1376 = vmatpush.bf16.msra.mxu0 0
    %1377 = vmatpush.bf16.msra.mxu0 0
    %1378 = vmatpush.bf16.msra.mxu0 0
    %1379 = vmatpush.bf16.msra.mxu0 %v520
    %1380 = vmatmul.bf16.gmra.mxu0 %v590
    %v1381 = vpop.f32.mrf.mxu0
    %v1382 = vadd.f32 %v200, %v1381
    %v1383 = vpop.f32.mrf.mxu0
    %1384 = vdwg.mxu0
    %1385 = vmatpush.bf16.msra.mxu0 0
    %1386 = vmatpush.bf16.msra.mxu0 0
    %1387 = vmatpush.bf16.msra.mxu0 0
    %1388 = vmatpush.bf16.msra.mxu0 0
    %1389 = vmatpush.bf16.msra.mxu0 0
    %1390 = vmatpush.bf16.msra.mxu0 0
    %1391 = vmatpush.bf16.msra.mxu0 0
    %1392 = vmatpush.bf16.msra.mxu0 %v521
    %1393 = vmatmul.bf16.gmra.mxu0 %v590
    %v1394 = vpop.f32.mrf.mxu0
    %v1395 = vadd.f32 %v201, %v1394
    %v1396 = vpop.f32.mrf.mxu0
    %1397 = vdwg.mxu0
    %1398 = vmatpush.bf16.msra.mxu0 0
    %1399 = vmatpush.bf16.msra.mxu0 0
    %1400 = vmatpush.bf16.msra.mxu0 0
    %1401 = vmatpush.bf16.msra.mxu0 0
    %1402 = vmatpush.bf16.msra.mxu0 0
    %1403 = vmatpush.bf16.msra.mxu0 0
    %1404 = vmatpush.bf16.msra.mxu0 0
    %1405 = vmatpush.bf16.msra.mxu0 %v522
    %1406 = vmatmul.bf16.gmra.mxu0 %v590
    %v1407 = vpop.f32.mrf.mxu0
    %v1408 = vadd.f32 %v202, %v1407
    %v1409 = vpop.f32.mrf.mxu0
    %1410 = vdwg.mxu0
    %1411 = vmatpush.bf16.msra.mxu0 0
    %1412 = vmatpush.bf16.msra.mxu0 0
    %1413 = vmatpush.bf16.msra.mxu0 0
    %1414 = vmatpush.bf16.msra.mxu0 0
    %1415 = vmatpush.bf16.msra.mxu0 0
    %1416 = vmatpush.bf16.msra.mxu0 0
    %1417 = vmatpush.bf16.msra.mxu0 0
    %1418 = vmatpush.bf16.msra.mxu0 %v523
    %1419 = vmatmul.bf16.gmra.mxu0 %v590
    %v1420 = vpop.f32.mrf.mxu0
    %v1421 = vadd.f32 %v203, %v1420
    %v1422 = vpop.f32.mrf.mxu0
    %1423 = vdwg.mxu0
    %1424 = vst [vmem:[%s3] sm:$0xff] %v602
    %1425 = vst [vmem:[%s3 + $0x8] sm:$0xff] %v615
    %1426 = vst [vmem:[%s3 + $0x10] sm:$0xff] %v628
    %1427 = vst [vmem:[%s3 + $0x18] sm:$0xff] %v641
    %1428 = vst [vmem:[%s3 + $0x20] sm:$0xff] %v654
    %1429 = vst [vmem:[%s3 + $0x28] sm:$0xff] %v667
    %1430 = vst [vmem:[%s3 + $0x30] sm:$0xff] %v680
    %1431 = vst [vmem:[%s3 + $0x38] sm:$0xff] %v693
    %1432 = vst [vmem:[%s3 + $0x40] sm:$0xff] %v706
    %1433 = vst [vmem:[%s3 + $0x48] sm:$0xff] %v719
    %1434 = vst [vmem:[%s3 + $0x50] sm:$0xff] %v732
    %1435 = vst [vmem:[%s3 + $0x58] sm:$0xff] %v745
    %1436 = vst [vmem:[%s3 + $0x60] sm:$0xff] %v758
    %1437 = vst [vmem:[%s3 + $0x68] sm:$0xff] %v771
    %1438 = vst [vmem:[%s3 + $0x70] sm:$0xff] %v784
    %1439 = vst [vmem:[%s3 + $0x78] sm:$0xff] %v797
    %1440 = vst [vmem:[%s3 + $0x80] sm:$0xff] %v810
    %1441 = vst [vmem:[%s3 + $0x88] sm:$0xff] %v823
    %1442 = vst [vmem:[%s3 + $0x90] sm:$0xff] %v836
    %1443 = vst [vmem:[%s3 + $0x98] sm:$0xff] %v849
    %1444 = vst [vmem:[%s3 + $0xa0] sm:$0xff] %v862
    %1445 = vst [vmem:[%s3 + $0xa8] sm:$0xff] %v875
    %1446 = vst [vmem:[%s3 + $0xb0] sm:$0xff] %v888
    %1447 = vst [vmem:[%s3 + $0xb8] sm:$0xff] %v901
    %1448 = vst [vmem:[%s3 + $0xc0] sm:$0xff] %v914
    %1449 = vst [vmem:[%s3 + $0xc8] sm:$0xff] %v927
    %1450 = vst [vmem:[%s3 + $0xd0] sm:$0xff] %v940
    %1451 = vst [vmem:[%s3 + $0xd8] sm:$0xff] %v953
    %1452 = vst [vmem:[%s3 + $0xe0] sm:$0xff] %v966
    %1453 = vst [vmem:[%s3 + $0xe8] sm:$0xff] %v979
    %1454 = vst [vmem:[%s3 + $0xf0] sm:$0xff] %v992
    %1455 = vst [vmem:[%s3 + $0xf8] sm:$0xff] %v1005
    %1456 = vst [vmem:[%s3 + $0x100] sm:$0xff] %v1018
    %1457 = vst [vmem:[%s3 + $0x108] sm:$0xff] %v1031
    %1458 = vst [vmem:[%s3 + $0x110] sm:$0xff] %v1044
    %1459 = vst [vmem:[%s3 + $0x118] sm:$0xff] %v1057
    %1460 = vst [vmem:[%s3 + $0x120] sm:$0xff] %v1070
    %1461 = vst [vmem:[%s3 + $0x128] sm:$0xff] %v1083
    %1462 = vst [vmem:[%s3 + $0x130] sm:$0xff] %v1096
    %1463 = vst [vmem:[%s3 + $0x138] sm:$0xff] %v1109
    %1464 = vst [vmem:[%s3 + $0x140] sm:$0xff] %v1122
    %1465 = vst [vmem:[%s3 + $0x148] sm:$0xff] %v1135
    %1466 = vst [vmem:[%s3 + $0x150] sm:$0xff] %v1148
    %1467 = vst [vmem:[%s3 + $0x158] sm:$0xff] %v1161
    %1468 = vst [vmem:[%s3 + $0x160] sm:$0xff] %v1174
    %1469 = vst [vmem:[%s3 + $0x168] sm:$0xff] %v1187
    %1470 = vst [vmem:[%s3 + $0x170] sm:$0xff] %v1200
    %1471 = vst [vmem:[%s3 + $0x178] sm:$0xff] %v1213
    %1472 = vst [vmem:[%s3 + $0x180] sm:$0xff] %v1226
    %1473 = vst [vmem:[%s3 + $0x188] sm:$0xff] %v1239
    %1474 = vst [vmem:[%s3 + $0x190] sm:$0xff] %v1252
    %1475 = vst [vmem:[%s3 + $0x198] sm:$0xff] %v1265
    %1476 = vst [vmem:[%s3 + $0x1a0] sm:$0xff] %v1278
    %1477 = vst [vmem:[%s3 + $0x1a8] sm:$0xff] %v1291
    %1478 = vst [vmem:[%s3 + $0x1b0] sm:$0xff] %v1304
    %1479 = vst [vmem:[%s3 + $0x1b8] sm:$0xff] %v1317
    %1480 = vst [vmem:[%s3 + $0x1c0] sm:$0xff] %v1330
    %1481 = vst [vmem:[%s3 + $0x1c8] sm:$0xff] %v1343
    %1482 = vst [vmem:[%s3 + $0x1d0] sm:$0xff] %v1356
    %1483 = vst [vmem:[%s3 + $0x1d8] sm:$0xff] %v1369
    %1484 = vst [vmem:[%s3 + $0x1e0] sm:$0xff] %v1382
    %1485 = vst [vmem:[%s3 + $0x1e8] sm:$0xff] %v1395
    %1486 = vst [vmem:[%s3 + $0x1f0] sm:$0xff] %v1408
    %1487 = vst [vmem:[%s3 + $0x1f8] sm:$0xff] %v1421
    // Predicated region
    $region26: #{embedding_forward.1} parent=1 // pred_check
      _
    $region27: #{embedding_forward.1} parent=1 // pred_check_branch
      %1489 = sbr.rel (0) target = $region29
    $region28: #{embedding_forward.1} parent=1 // pred_region
      _
    $region29: #{embedding_forward.1} parent=1 // pred_fallthru
      _
    // Predicated region
    $region30: #{embedding_forward.1} parent=1 // pred_check
      _
    $region31: #{embedding_forward.1} parent=1 // pred_check_branch
      %1491 = sbr.rel (0) target = $region33
    $region32: #{embedding_forward.1} parent=1 // pred_region
      _
    $region33: #{embedding_forward.1} parent=1 // pred_fallthru
      _
    %1492 = vsyncpa [#allocation3], 1
    %1493 = vsyncpa [#allocation5], 1

</llo_original>
